<compile_context>
chip_gen: v5e
topology: v5e:2x2
jax: 0.10.0
libtpu: 0.0.40
codegen_flags: <defaults>
</compile_context>

<pallas_src>
import functools

import numpy as np
import jax
import jax.numpy as jnp
from jax.experimental import pallas as pl
from jax.experimental.pallas import tpu as pltpu

_LANE = 128
_NUM_CORE_SPLIT = 2  # frequency tiles are split 2-way; used by megacore chips


def _round_up(x, m):
    return (x + m - 1) // m * m


@functools.lru_cache(maxsize=None)
def _vmem_limit_bytes():
    """Generation-aware scoped-VMEM limit (leave ~25% headroom)."""
    try:
        cap = int(pltpu.get_tpu_info().vmem_capacity_bytes)
    except Exception:
        cap = 64 * 1024 * 1024          # conservative (v7x per-TC) fallback
    return int(min(cap * 3 // 4, 112 * 1024 * 1024))


@functools.lru_cache(maxsize=None)
def _plan(N, row_tile=None):
    """Tile plan: (TN, TK, N_pad, KT, TF) for a length-N signal."""
    vmem_limit = _vmem_limit_bytes()
    nfreq = N // 2 + 1
    # Frequency (lane) tile: multiple of 128 so re/im slices are vreg aligned.
    TN = min(256, _round_up(nfreq, _LANE))

    # Row (K) tile of W / of d's columns.  Per-buffer budget accounts for the
    # double-buffered bf16 W window plus its f32 promotion before the MXU.
    w_buf = int(np.clip(vmem_limit // 16, 1 << 20, 4 << 20))
    tk_max = max(512, (w_buf // (2 * TN * 2)) // _LANE * _LANE)
    if row_tile is not None:
        assert row_tile % _LANE == 0, "row_tile must be a multiple of 128"
        TK = int(row_tile)
        N_pad = _round_up(N, TK) if TK < N else N
    elif N <= tk_max:
        TK, N_pad = N, N
    else:
        TK = tk_max
        N_pad = _round_up(N, TK)
    KT = N_pad // TK

    # Frequency tiles per core (padded so the core split is even).
    t_total = (nfreq + TN - 1) // TN
    TF = -(-t_total // _NUM_CORE_SPLIT)
    return TN, TK, N_pad, KT, TF


@functools.lru_cache(maxsize=None)
def _dft_table(N, row_tile=None):
    """Half-spectrum DFT matrix, Hermitian weights and 1/N folded in.

    Shape (N_pad, C*TF*2*TN) bf16; columns of frequency tile t = c*TF + f are
    laid out as [Re tile | Im tile] so one matmul per grid step yields both
    parts, and padded rows/columns are zero (exact).
    """
    TN, TK, N_pad, KT, TF = _plan(N, row_tile)
    C = _NUM_CORE_SPLIT
    nfreq = N // 2 + 1
    t_cols = C * TF
    ncols = t_cols * TN

    wk = np.full((nfreq,), 2.0, dtype=np.float64)   # |X[k]|==|X[N-k]| weights
    wk[0] = 1.0
    if N % 2 == 0:
        wk[-1] = 1.0
    scale = (wk / N)[None, :]                       # fold norm='forward' 1/N

    ang = (-2.0 * np.pi / N) * np.outer(
        np.arange(N, dtype=np.float64), np.arange(nfreq, dtype=np.float64))
    w_re = np.zeros((N_pad, ncols), dtype=np.float32)
    w_im = np.zeros((N_pad, ncols), dtype=np.float32)
    w_re[:N, :nfreq] = (np.cos(ang) * scale).astype(np.float32)
    w_im[:N, :nfreq] = (np.sin(ang) * scale).astype(np.float32)

    w_cat = np.stack([w_re.reshape(N_pad, t_cols, TN),
                      w_im.reshape(N_pad, t_cols, TN)], axis=2)
    w_cat = w_cat.reshape(N_pad, t_cols * 2 * TN)
    return jnp.asarray(w_cat, dtype=jnp.bfloat16)


def _make_kernel(TN, TF, KT, inv_total):
    def kernel(d_ref, w_ref, o_ref, acc_ref, s_ref):
        f = pl.program_id(1)   # frequency tile (within this core's share)
        k = pl.program_id(2)   # K (row) tile of W / columns of d

        @pl.when((f == 0) & (k == 0))
        def _():               # per-core running-sum init
            s_ref[...] = jnp.zeros_like(s_ref)

        @pl.when(k == 0)
        def _():               # per-frequency-tile matmul accumulator init
            acc_ref[...] = jnp.zeros_like(acc_ref)

        # Streamed half-spectrum DFT: one matmul per (freq tile, K tile).
        # d is f32, W is bf16 (promoted); weights/1/N already folded into W.
        acc_ref[...] += jnp.dot(d_ref[...], w_ref[...],
                                preferred_element_type=jnp.float32)

        @pl.when(k == KT - 1)
        def _():
            m = acc_ref[...]
            re = m[:, :TN]                    # 128-aligned slices: free
            im = m[:, TN:]
            mag = jnp.sqrt(re * re + im * im)
            s_ref[...] += jnp.sum(jnp.sum(mag, axis=1, keepdims=True),
                                  axis=0, keepdims=True)

        @pl.when((f == TF - 1) & (k == KT - 1))
        def _():                              # single output write per core
            o_ref[0] = s_ref[...] * inv_total

    return kernel


def fft_loss(predictions, targets, *, row_tile=None):
    """Pallas implementation of fftLoss.forward(predictions, targets)."""
    assert predictions.shape == targets.shape and predictions.ndim == 2
    B, N = predictions.shape
    C = _NUM_CORE_SPLIT
    TN, TK, N_pad, KT, TF = _plan(N, row_tile)
    w_cat = _dft_table(N, row_tile)

    p32 = predictions.astype(jnp.float32)
    t32 = targets.astype(jnp.float32)

    # ---- negative Pearson (wrapper / XLA).  Pearson is exactly invariant to
    #      the reference's global (mean, std) normalization, so that pass is
    #      skipped.  O(B*N) work -> negligible vs. the W stream. -------------
    nf = jnp.float32(N)
    sum_x = jnp.sum(p32, axis=1)
    sum_y = jnp.sum(t32, axis=1)
    sum_xy = jnp.sum(p32 * t32, axis=1)
    sum_x2 = jnp.sum(p32 * p32, axis=1)
    sum_y2 = jnp.sum(t32 * t32, axis=1)
    pearson = (nf * sum_xy - sum_x * sum_y) / jnp.sqrt(
        (nf * sum_x2 - sum_x ** 2) * (nf * sum_y2 - sum_y ** 2))
    neg = jnp.mean(1.0 - pearson)

    # ---- FFT linearity: fft(p) - fft(t) == fft(p - t); keep d in f32. ------
    d = p32 - t32
    if N_pad != N:
        d = jnp.pad(d, ((0, 0), (0, N_pad - N)))   # zero cols -> exact

    inv_total = 1.0 / float(B * N)
    kernel = _make_kernel(TN, TF, KT, inv_total)

    cost = pl.CostEstimate(
        flops=int(2 * B * N_pad * (2 * TN) * C * TF + 3 * B * C * TF * TN),
        transcendentals=int(B * C * TF * TN),
        bytes_accessed=int(w_cat.size * 2 + d.size * 4 * C * TF + C * 4),
    )

    partial = pl.pallas_call(
        kernel,
        out_shape=jax.ShapeDtypeStruct((C, 1, 1), jnp.float32),
        grid_spec=pltpu.PrefetchScalarGridSpec(
            num_scalar_prefetch=0,
            grid=(C, TF, KT),
            in_specs=[
                # d: only the K-tile of columns needed this step
                pl.BlockSpec((B, TK), lambda c, f, k: (0, k)),
                # W: (row tile, fused [Re|Im] frequency tile), streamed
                pl.BlockSpec((TK, 2 * TN), lambda c, f, k: (k, c * TF + f)),
            ],
            out_specs=pl.BlockSpec((1, 1, 1), lambda c, f, k: (c, 0, 0)),
            scratch_shapes=[
                pltpu.VMEM((B, 2 * TN), jnp.float32),   # K-tile accumulator
                pltpu.VMEM((1, 1), jnp.float32),        # per-core running sum
            ],
        ),
        compiler_params=pltpu.CompilerParams(
            dimension_semantics=("parallel", "arbitrary", "arbitrary"),
            vmem_limit_bytes=_vmem_limit_bytes(),
        ),
        cost_estimate=cost,
    )(d, w_cat)

    return jnp.sum(partial) + neg


def fft_loss_ref(p, t):
    """Pure-JAX reference matching the PyTorch semantics (for validation)."""
    p = p.astype(jnp.float32)
    t = t.astype(jnp.float32)
    N = p.shape[1]
    pn = (p - jnp.mean(p)) / jnp.std(p, ddof=1)
    tn = (t - jnp.mean(t)) / jnp.std(t, ddof=1)
    sum_x = jnp.sum(pn, axis=1)
    sum_y = jnp.sum(tn, axis=1)
    sum_xy = jnp.sum(pn * tn, axis=1)
    sum_x2 = jnp.sum(pn * pn, axis=1)
    sum_y2 = jnp.sum(tn * tn, axis=1)
    pearson = (N * sum_xy - sum_x * sum_y) / jnp.sqrt(
        (N * sum_x2 - sum_x ** 2) * (N * sum_y2 - sum_y ** 2))
    neg = jnp.mean(1.0 - pearson)
    P = jnp.fft.fft(p, axis=1) / N   # norm='forward'
    T = jnp.fft.fft(t, axis=1) / N
    l1 = jnp.mean(jnp.abs(P - T))
    return l1 + neg


def _check(B, N, seed, **kw):
    kp, kt = jax.random.split(jax.random.PRNGKey(seed))
    predictions = jax.random.normal(kp, (B, N), dtype=jnp.float32)
    targets = jax.random.normal(kt, (B, N), dtype=jnp.float32)
    out = fft_loss(predictions, targets, **kw)
    jax.block_until_ready(out)
    ref = fft_loss_ref(predictions, targets)
    assert np.allclose(np.asarray(out), np.asarray(ref),
                       rtol=2e-3, atol=2e-3), (B, N, float(out), float(ref))
    return out


if __name__ == "__main__":
    # Primary small example (as in the module spec).
    _check(4, 64, 0)
    # Exercise multi-frequency-tile accumulation + the zero-padded tile.
    _check(2, 2048, 0)
    # Exercise the K (row) tiling path on-device by forcing a small row tile.
    _check(2, 512, 0, row_tile=128)
    print("KERNEL_OK")
</pallas_src>

<mosaic_0001>
module attributes {stable_mosaic.version = 11 : i64} {
  func.func @kernel(%arg0: i32, %arg1: i32, %arg2: i32, %arg3: memref<4x64xf32, #tpu.memory_space<vmem>>, %arg4: memref<64x256xbf16, #tpu.memory_space<vmem>>, %arg5: memref<1x1x1xf32, #tpu.memory_space<vmem>>, %arg6: memref<4x256xf32, #tpu.memory_space<vmem>>, %arg7: memref<1x1xf32, #tpu.memory_space<vmem>>) attributes {dimension_semantics = [#tpu.dimension_semantics<parallel>, #tpu.dimension_semantics<arbitrary>, #tpu.dimension_semantics<arbitrary>], iteration_bounds = array<i64: 2, 1, 1>, scalar_prefetch = 0 : i64, scratch_operands = 2 : i64, tpu.core_type = #tpu.core_type<tc>, window_params = [{transform_indices = @transform_0, window_bounds = array<i64: 4, 64>}, {transform_indices = @transform_1, window_bounds = array<i64: 64, 256>}, {transform_indices = @transform_2, window_bounds = array<i64: 1, 1, 1>}]} {
    %c0_i32 = arith.constant 0 : i32
    %0 = arith.cmpi eq, %arg1, %c0_i32 : i32
    %c0_i32_0 = arith.constant 0 : i32
    %1 = arith.cmpi eq, %arg2, %c0_i32_0 : i32
    %2 = arith.andi %0, %1 : i1
    %3 = arith.extui %2 : i1 to i32
    %c0_i32_1 = arith.constant 0 : i32
    %4 = arith.cmpi ne, %3, %c0_i32_1 : i32
    scf.if %4 {
      %cst_16 = arith.constant 0.000000e+00 : f32
      %22 = vector.broadcast %cst_16 : f32 to vector<1x1xf32>
      %c0_17 = arith.constant 0 : index
      %c0_18 = arith.constant 0 : index
      %23 = vector.load %arg7[%c0_17, %c0_18] : memref<1x1xf32, #tpu.memory_space<vmem>>, vector<1x1xf32>
      tpu.vector_store %arg7[%c0_17, %c0_18], %22 {strides = array<i32>} : memref<1x1xf32, #tpu.memory_space<vmem>>, vector<1x1xf32>,
    } else {
    }
    %c0_i32_2 = arith.constant 0 : i32
    %5 = arith.cmpi eq, %arg2, %c0_i32_2 : i32
    %6 = arith.extui %5 : i1 to i32
    %c0_i32_3 = arith.constant 0 : i32
    %7 = arith.cmpi ne, %6, %c0_i32_3 : i32
    scf.if %7 {
      %cst_16 = arith.constant 0.000000e+00 : f32
      %22 = vector.broadcast %cst_16 : f32 to vector<4x256xf32>
      %c0_17 = arith.constant 0 : index
      %c0_18 = arith.constant 0 : index
      %23 = vector.load %arg6[%c0_17, %c0_18] : memref<4x256xf32, #tpu.memory_space<vmem>>, vector<4x256xf32>
      tpu.vector_store %arg6[%c0_17, %c0_18], %22 {strides = array<i32>} : memref<4x256xf32, #tpu.memory_space<vmem>>, vector<4x256xf32>,
    } else {
    }
    %c0 = arith.constant 0 : index
    %c0_4 = arith.constant 0 : index
    %8 = vector.load %arg6[%c0, %c0_4] : memref<4x256xf32, #tpu.memory_space<vmem>>, vector<4x256xf32>
    %c0_5 = arith.constant 0 : index
    %c0_6 = arith.constant 0 : index
    %9 = vector.load %arg3[%c0_5, %c0_6] : memref<4x64xf32, #tpu.memory_space<vmem>>, vector<4x64xf32>
    %c0_7 = arith.constant 0 : index
    %c0_8 = arith.constant 0 : index
    %10 = vector.load %arg4[%c0_7, %c0_8] : memref<64x256xbf16, #tpu.memory_space<vmem>>, vector<64x256xbf16>
    %cst = arith.constant dense<0.000000e+00> : vector<4x256xf32>
    %11 = tpu.matmul %9, %10, %cst {dimension_numbers = #tpu.dot_dimension_numbers<[1], [0], [0], [1], [0, 0, 1, 1], [], []>} : vector<4x64xf32>, vector<64x256xbf16>, vector<4x256xf32> -> vector<4x256xf32>
    %12 = arith.addf %8, %11 : vector<4x256xf32>
    %c0_9 = arith.constant 0 : index
    %c0_10 = arith.constant 0 : index
    %13 = vector.load %arg6[%c0_9, %c0_10] : memref<4x256xf32, #tpu.memory_space<vmem>>, vector<4x256xf32>
    tpu.vector_store %arg6[%c0_9, %c0_10], %12 {strides = array<i32>} : memref<4x256xf32, #tpu.memory_space<vmem>>, vector<4x256xf32>,
    %c0_i32_11 = arith.constant 0 : i32
    %14 = arith.cmpi eq, %arg2, %c0_i32_11 : i32
    %15 = arith.extui %14 : i1 to i32
    %c0_i32_12 = arith.constant 0 : i32
    %16 = arith.cmpi ne, %15, %c0_i32_12 : i32
    scf.if %16 {
      %c0_16 = arith.constant 0 : index
      %c0_17 = arith.constant 0 : index
      %22 = vector.load %arg6[%c0_16, %c0_17] : memref<4x256xf32, #tpu.memory_space<vmem>>, vector<4x256xf32>
      %23 = vector.extract_strided_slice %22 {offsets = [0, 0], sizes = [4, 128], strides = [1, 1]} : vector<4x256xf32> to vector<4x128xf32>
      %24 = vector.extract_strided_slice %22 {offsets = [0, 128], sizes = [4, 128], strides = [1, 1]} : vector<4x256xf32> to vector<4x128xf32>
      %25 = arith.mulf %23, %23 : vector<4x128xf32>
      %26 = arith.mulf %24, %24 : vector<4x128xf32>
      %27 = arith.addf %25, %26 : vector<4x128xf32>
      %28 = math.sqrt %27 : vector<4x128xf32>
      %c0_18 = arith.constant 0 : index
      %c0_19 = arith.constant 0 : index
      %29 = vector.load %arg7[%c0_18, %c0_19] : memref<1x1xf32, #tpu.memory_space<vmem>>, vector<1x1xf32>
      %cst_20 = arith.constant dense<0.000000e+00> : vector<4xf32>
      %30 = vector.multi_reduction <add>, %28, %cst_20 [1] : vector<4x128xf32> to vector<4xf32>
      %31 = vector.shape_cast %30 : vector<4xf32> to vector<4x1xf32>
      %cst_21 = arith.constant dense<0.000000e+00> : vector<1xf32>
      %32 = vector.multi_reduction <add>, %31, %cst_21 [0] : vector<4x1xf32> to vector<1xf32>
      %33 = vector.shape_cast %32 : vector<1xf32> to vector<1x1xf32>
      %34 = arith.addf %29, %33 : vector<1x1xf32>
      %c0_22 = arith.constant 0 : index
      %c0_23 = arith.constant 0 : index
      %35 = vector.load %arg7[%c0_22, %c0_23] : memref<1x1xf32, #tpu.memory_space<vmem>>, vector<1x1xf32>
      tpu.vector_store %arg7[%c0_22, %c0_23], %34 {strides = array<i32>} : memref<1x1xf32, #tpu.memory_space<vmem>>, vector<1x1xf32>,
    } else {
    }
    %c0_i32_13 = arith.constant 0 : i32
    %17 = arith.cmpi eq, %arg1, %c0_i32_13 : i32
    %c0_i32_14 = arith.constant 0 : i32
    %18 = arith.cmpi eq, %arg2, %c0_i32_14 : i32
    %19 = arith.andi %17, %18 : i1
    %20 = arith.extui %19 : i1 to i32
    %c0_i32_15 = arith.constant 0 : i32
    %21 = arith.cmpi ne, %20, %c0_i32_15 : i32
    scf.if %21 {
      %c0_16 = arith.constant 0 : index
      %c0_17 = arith.constant 0 : index
      %22 = vector.load %arg7[%c0_16, %c0_17] : memref<1x1xf32, #tpu.memory_space<vmem>>, vector<1x1xf32>
      %cst_18 = arith.constant 3.906250e-03 : f32
      %23 = vector.broadcast %cst_18 : f32 to vector<1x1xf32>
      %24 = arith.mulf %22, %23 : vector<1x1xf32>
      %c0_19 = arith.constant 0 : index
      %c0_20 = arith.constant 0 : index
      %c0_21 = arith.constant 0 : index
      %25 = vector.load %arg5[%c0_19, %c0_20, %c0_21] : memref<1x1x1xf32, #tpu.memory_space<vmem>>, vector<1x1x1xf32>
      %26 = vector.shape_cast %25 : vector<1x1x1xf32> to vector<1x1xf32>
      %27 = vector.shape_cast %24 : vector<1x1xf32> to vector<1x1x1xf32>
      tpu.vector_store %arg5[%c0_19, %c0_20, %c0_21], %27 {strides = array<i32>} : memref<1x1x1xf32, #tpu.memory_space<vmem>>, vector<1x1x1xf32>,
    } else {
    }
    return
  }
  func.func @transform_0(%arg0: i32, %arg1: i32, %arg2: i32) -> (i32, i32) {
    %c0_i32 = arith.constant 0 : i32
    %c0_i32_0 = arith.constant 0 : i32
    return %c0_i32, %arg2 : i32, i32
  }
  func.func @transform_1(%arg0: i32, %arg1: i32, %arg2: i32) -> (i32, i32) {
    %c1_i32 = arith.constant 1 : i32
    %0 = arith.muli %arg0, %c1_i32 : i32
    %1 = arith.addi %0, %arg1 : i32
    %c0_i32 = arith.constant 0 : i32
    return %arg2, %1 : i32, i32
  }
  func.func @transform_2(%arg0: i32, %arg1: i32, %arg2: i32) -> (i32, i32, i32) {
    %c0_i32 = arith.constant 0 : i32
    %c0_i32_0 = arith.constant 0 : i32
    %c0_i32_1 = arith.constant 0 : i32
    return %arg0, %c0_i32, %c0_i32_0 : i32, i32, i32
  }
}

</mosaic_0001>

<llo_original>
// kernel: tpu_custom_call.1
$region0: #{tpu_custom_call.1}
  #allocation0 [shape = 'u32[]', space=smem, size = 0x4, offset = 0x4, fixed_abs, tag = 'smem constant byte address 0x4 - core index']
  #allocation1 [shape = 'u32[72,128]{1,0:T(1,128)}', space=vmem, size = 0x9000, scoped, tag = 'internal scratch']
  #allocation2 [shape = 'f32[4,256]{1,0:T(4,128)}', space=vmem, size = 0x1000, scoped, tag = 'scratch operand']
  #allocation3 [shape = 'f32[1,1]{1,0:T(1,128)}', space=vmem, size = 0x200, scoped, tag = 'scratch operand']
  %s0 = inlined_call_operand.hbm [shape: f32[4,64], index: 0, kind: input, shape index: {}]
  %s1 = inlined_call_operand.hbm [shape: bf16[64,512], index: 1, kind: input, shape index: {}]
  %s2 = inlined_call_operand.vmem [shape: f32[2,1,1], index: 2, kind: output, shape index: {}]
  %s3 = sld [smem:[#allocation0]]
  $region65: #{tpu_custom_call.1} parent=0
    _
  %s5 = ssub.s32 1, %s3
  %s6 = scalar_select 0, %s5, %s3
  $region1: #{tpu_custom_call.1} parent=0
    #allocation4 [shape = 'u8[2048]{0}', space=vmem, size = 0x800, scoped, tag = 'input window, operand 0, single buffered']
    #allocation5 [shape = 's32[2]{0}', space=sflag, size = 0x8, scoped, tag = 'scoped memory for tpu_custom_call.1']
    #allocation6 [shape = 'u8[65536]{0}', space=vmem, size = 0x10000, scoped, tag = 'input window, operand 1']
    #allocation7 [shape = 's32[2]{0}', space=sflag, size = 0x8, scoped, tag = 'scoped memory for tpu_custom_call.1']
    %7 = vsyncpa [#allocation5], 0
    %8 = vsyncpa [#allocation7], 0
    %s9 = scalar_lea.sflag [#allocation7], 1
    %10 = vsyncpa %s9, 0
    loop: start=0, step=1, limit=4
    $region2: #{tpu_custom_call.1} parent=1 // loop_pre_header
      _
    $region3: #{tpu_custom_call.1} parent=1 // loop_header
      %s12 = sphi 0, %s16
      %p13 = scmp.ge.s32.totalorder %s12, 4
      %s19 = sphi 0, %s38
      %s20 = sphi 0, %s34
      %s21 = sphi 0, %s30
      %s22 = sphi 0, %s19
      %s23 = sphi 0, %s20
      %s24 = sphi 0, %s21
      %s25 = sphi 0, %s22
      %s26 = sphi 0, %s23
      %s27 = sphi 0, %s24
      %s41 = sphi 0, %s43
      %s44 = sphi 0, %s41
      %s45 = sphi 0, %s44
      %s61 = sphi 0, %s45
      %s71 = sphi 0, %s73
      %s74 = sphi 0, %s71
      %s75 = sphi 0, %s74
      %s91 = sphi 0, %s75
      %s97 = sphi 0, %s99
      %s100 = sphi 0, %s97
      %s101 = sphi 0, %s100
      %s117 = sphi 0, %s101
    $region4: #{tpu_custom_call.1} parent=1 // loop_header_branch
      %15 = sbr.rel (%p13) target = $region8
    $region5: #{tpu_custom_call.1} parent=1 // loop_body
      %s17 = ssub.s32 %s12, 1
      %s18 = ssub.s32 %s12, 2
      %s28 = sadd.s32 1, %s21
      %p29 = scmp.ge.s32.totalorder %s28, 1
      %s30 = scalar_select %p29, 0, %s28
      %s31 = sadd.s32 1, %s20
      %s32 = scalar_select %p29, %s31, %s20
      %p33 = scmp.ge.s32.totalorder %s32, 1
      %s34 = scalar_select %p33, 0, %s32
      %s35 = sadd.s32 1, %s19
      %s36 = scalar_select %p33, %s35, %s19
      %p37 = scmp.ge.s32.totalorder %s36, 2
      %s38 = scalar_select %p37, 0, %s36
      %s39 = ssub.s32 %s21, %s30
      %p40 = scmp.eq.s32.totalorder %s39, 0
      %s42 = sadd.s32 %s41, 1
      %s43 = scalar_select %p40, %s41, %s42
      %p46 = pneg %p40
      %p47 = scmp.eq.s32.totalorder %s12, 1
      %p48 = por %p46, %p47
      %p49 = scmp.ne.s32.totalorder %s41, %s44
      %p50 = scmp.eq.s32.totalorder %s12, 0
      %p51 = por %p49, %p50
      %p52 = scmp.ne.s32.totalorder %s41, %s44
      %p53 = scmp.eq.s32.totalorder %s17, 1
      %p54 = por %p52, %p53
      %p55 = scmp.ne.s32.totalorder %s44, %s45
      %p56 = scmp.eq.s32.totalorder %s17, 0
      %p57 = por %p55, %p56
      %p58 = scmp.ne.s32.totalorder %s44, %s45
      %p59 = scmp.eq.s32.totalorder %s18, 1
      %p60 = por %p58, %p59
      %p62 = scmp.ne.s32.totalorder %s45, %s61
      %p63 = scmp.eq.s32.totalorder %s18, 0
      %p64 = por %p62, %p63
      %s65 = sadd.s32 %s19, %s20
      %s66 = sadd.s32 %s38, %s34
      %s67 = ssub.s32 %s21, %s30
      %s68 = ssub.s32 %s65, %s66
      %s69 = sor.u32 %s67, %s68
      %p70 = scmp.eq.s32.totalorder %s69, 0
      %s72 = sadd.s32 %s71, 1
      %s73 = scalar_select %p70, %s71, %s72
      %p76 = pneg %p70
      %p77 = scmp.eq.s32.totalorder %s12, 1
      %p78 = por %p76, %p77
      %p79 = scmp.ne.s32.totalorder %s71, %s74
      %p80 = scmp.eq.s32.totalorder %s12, 0
      %p81 = por %p79, %p80
      %p82 = scmp.ne.s32.totalorder %s71, %s74
      %p83 = scmp.eq.s32.totalorder %s17, 1
      %p84 = por %p82, %p83
      %p85 = scmp.ne.s32.totalorder %s74, %s75
      %p86 = scmp.eq.s32.totalorder %s17, 0
      %p87 = por %p85, %p86
      %p88 = scmp.ne.s32.totalorder %s74, %s75
      %p89 = scmp.eq.s32.totalorder %s18, 1
      %p90 = por %p88, %p89
      %p92 = scmp.ne.s32.totalorder %s75, %s91
      %p93 = scmp.eq.s32.totalorder %s18, 0
      %p94 = por %p92, %p93
      %s95 = ssub.s32 %s19, %s38
      %p96 = scmp.eq.s32.totalorder %s95, 0
      %s98 = sadd.s32 %s97, 1
      %s99 = scalar_select %p96, %s97, %s98
      %p102 = pneg %p96
      %p103 = scmp.eq.s32.totalorder %s12, 1
      %p104 = por %p102, %p103
      %p105 = scmp.ne.s32.totalorder %s97, %s100
      %p106 = scmp.eq.s32.totalorder %s12, 0
      %p107 = por %p105, %p106
      %p108 = scmp.ne.s32.totalorder %s97, %s100
      %p109 = scmp.eq.s32.totalorder %s17, 1
      %p110 = por %p108, %p109
      %p111 = scmp.ne.s32.totalorder %s100, %s101
      %p112 = scmp.eq.s32.totalorder %s17, 0
      %p113 = por %p111, %p112
      %p114 = scmp.ne.s32.totalorder %s100, %s101
      %p115 = scmp.eq.s32.totalorder %s18, 1
      %p116 = por %p114, %p115
      %p118 = scmp.ne.s32.totalorder %s101, %s117
      %p119 = scmp.eq.s32.totalorder %s18, 0
      %p120 = por %p118, %p119
      %p121 = scmp.le.s32.totalorder 1, %s12
      %p122 = scmp.lt.s32.totalorder %s12, 3
      %p123 = pnand %p121, %p122
      %p124 = pneg %p123
      // Predicated region
      $region9: #{tpu_custom_call.1} parent=5 // pred_check
        _
      $region10: #{tpu_custom_call.1} parent=5 // pred_check_branch
        %126 = sbr.rel (%p123) target = $region12
      $region11: #{tpu_custom_call.1} parent=5 // pred_region
        %s127 = ssub.s32 %s12, 1
        // Predicated region
        $region13: #{tpu_custom_call.1} parent=11 // pred_check
          %p128 = pneg %p57
        $region14: #{tpu_custom_call.1} parent=11 // pred_check_branch
          %130 = sbr.rel (%p128) target = $region16
        $region15: #{tpu_custom_call.1} parent=11 // pred_region
          %132 = vsyncadd [#allocation5], 0
          %s133 = smul.addr %s24, 4
          %s134 = scalar_lea.hbm %s0, %s133
          %s136 = sshll.u32 %s134, 4
          %s137 = int_to_ptr.hbm [resolvable:$true] %s136
          %s138 = sshll.u32 [#allocation4], 4
          %s139 = int_to_ptr.vmem [resolvable:$true] %s138
          %141 = dma.hbm_to_vmem [thread:$0]  %s137, 64, %s139, [#allocation5]
        $region16: #{tpu_custom_call.1} parent=11 // pred_fallthru
          _
      $region12: #{tpu_custom_call.1} parent=5 // pred_fallthru
        _
      %p142 = scmp.lt.s32.totalorder %s12, 2
      // Predicated region
      $region17: #{tpu_custom_call.1} parent=5 // pred_check
        %p143 = pneg %p142
      $region18: #{tpu_custom_call.1} parent=5 // pred_check_branch
        %145 = sbr.rel (%p143) target = $region20
      $region19: #{tpu_custom_call.1} parent=5 // pred_region
        // Predicated region
        $region21: #{tpu_custom_call.1} parent=19 // pred_check
          %p146 = pneg %p81
        $region22: #{tpu_custom_call.1} parent=19 // pred_check_branch
          %148 = sbr.rel (%p146) target = $region24
        $region23: #{tpu_custom_call.1} parent=19 // pred_region
          %s149 = sand.u32 %s71, 1
          %s150 = scalar_lea.sflag [#allocation7], %s149
          %s151 = sand.u32 %s71, 1
          %s152 = smul.addr %s151, 64
          %s153 = scalar_lea.vmem [#allocation6], %s152
          %s154 = sadd.s32 %s19, %s20
          %s155 = smul.u32 8, %s21
          %s156 = smul.u32 2, %s154
          %158 = vsyncadd %s150, 0
          %s159 = smul.addr %s155, 4
          %s160 = sadd.s32 %s156, %s159
          %s161 = smul.addr %s160, 4
          %s162 = scalar_lea.hbm %s1, %s161
          %s163 = sshll.u32 %s162, 4
          %s164 = int_to_ptr.hbm [resolvable:$true] %s163
          %s165 = sshll.u32 %s153, 4
          %s166 = int_to_ptr.vmem [resolvable:$true] %s165
          %171 = dma.hbm_to_vmem [thread:$0]  %s164, 1024, %s166, %s150, 256, 128, 8
        $region24: #{tpu_custom_call.1} parent=19 // pred_fallthru
          _
      $region20: #{tpu_custom_call.1} parent=5 // pred_fallthru
        _
      %p172 = scmp.le.s32.totalorder 1, %s12
      %p173 = scmp.lt.s32.totalorder %s12, 3
      %p174 = pnand %p172, %p173
      %p175 = pneg %p174
      // Predicated region
      $region25: #{tpu_custom_call.1} parent=5 // pred_check
        _
      $region26: #{tpu_custom_call.1} parent=5 // pred_check_branch
        %177 = sbr.rel (%p174) target = $region28
      $region27: #{tpu_custom_call.1} parent=5 // pred_region
        %s178 = ssub.s32 %s12, 1
        // Predicated region
        $region29: #{tpu_custom_call.1} parent=27 // pred_check
          %p179 = pneg %p57
        $region30: #{tpu_custom_call.1} parent=27 // pred_check_branch
          %181 = sbr.rel (%p179) target = $region32
        $region31: #{tpu_custom_call.1} parent=27 // pred_region
          %183 = dma.done [#allocation5], 64
        $region32: #{tpu_custom_call.1} parent=27 // pred_fallthru
          _
        %s184 = sand.u32 %s74, 1
        %s185 = scalar_lea.sflag [#allocation7], %s184
        %s186 = sand.u32 %s74, 1
        %s187 = smul.addr %s186, 64
        %s188 = scalar_lea.vmem [#allocation6], %s187
        // Predicated region
        $region33: #{tpu_custom_call.1} parent=27 // pred_check
          %p189 = pneg %p87
        $region34: #{tpu_custom_call.1} parent=27 // pred_check_branch
          %191 = sbr.rel (%p189) target = $region36
        $region35: #{tpu_custom_call.1} parent=27 // pred_region
          %193 = dma.done %s185, 1024
        $region36: #{tpu_custom_call.1} parent=27 // pred_fallthru
          _
        %p194 = pneg %p57
        %p195 = pneg %p54
        %s196 = sand.u32 %s74, 1
        %s197 = scalar_lea.sflag [#allocation7], %s196
        %s198 = sand.u32 %s74, 1
        %s199 = smul.addr %s198, 64
        %s200 = scalar_lea.vmem [#allocation6], %s199
        %p201 = pneg %p87
        %p202 = pneg %p84
        %p203 = pneg %p113
        %p204 = pneg %p110
        %p205 = scmp.lt.s32.totalorder %s22, 1
        %s206 = scalar_select %p205, %s22, 1
        %s207 = scalar_lea.vmem %s2, %s206
        %s208 = sadd.s32 %s22, %s23
        %s209 = smul.u32 8, %s24
        %s210 = smul.u32 2, %s208
        %p211 = scmp.lt.s32.totalorder %s22, 1
        %s212 = scalar_select %p211, %s22, 1
        %s213 = scalar_lea.vmem %s2, %s212
        %p215 = scmp.eq.s32.totalorder %s23, 0
        %p216 = scmp.eq.s32.totalorder %s24, 0
        %p217 = pnand %p215, %p216
        %p218 = pneg %p217
        // Predicated region
        $region37: #{tpu_custom_call.1} parent=27 // pred_check
          _
        $region38: #{tpu_custom_call.1} parent=27 // pred_check_branch
          %220 = sbr.rel (%p217) target = $region40
        $region39: #{tpu_custom_call.1} parent=27 // pred_region
          %vm221 = vcmask 0
          %222 = vst.msk [vmem:[#allocation3] sm:$0x1] %vm221, 0.0
        $region40: #{tpu_custom_call.1} parent=27 // pred_fallthru
          _
        // Predicated region
        $region41: #{tpu_custom_call.1} parent=27 // pred_check
          %p223 = pneg %p216
        $region42: #{tpu_custom_call.1} parent=27 // pred_check_branch
          %225 = sbr.rel (%p223) target = $region44
        $region43: #{tpu_custom_call.1} parent=27 // pred_region
          %226 = vst [vmem:[#allocation2] sm:$0xff] 0.0
        $region44: #{tpu_custom_call.1} parent=27 // pred_fallthru
          _
        %v227 = vld [vmem:[#allocation2] sm:$0xff]
        %v228 = vld [vmem:[#allocation4] sm:$0xf]
        %v229 = vld [vmem:[%s188] sm:$0xff]
        %v230 = vld [vmem:[%s188 + $0x8] sm:$0xff]
        %v231 = vld [vmem:[%s188 + $0x10] sm:$0xff]
        %v232 = vld [vmem:[%s188 + $0x18] sm:$0xff]
        %v233 = vld [vmem:[%s188 + $0x20] sm:$0xff]
        %v234 = vld [vmem:[%s188 + $0x28] sm:$0xff]
        %v235 = vld [vmem:[%s188 + $0x30] sm:$0xff]
        %v236 = vld [vmem:[%s188 + $0x38] sm:$0xff]
        %v245 = vunpack.c.l.b16 %v229
        %v246 = vunpack.c.h.b16 %v229
        %v247 = vunpack.c.l.b16 %v230
        %v248 = vunpack.c.h.b16 %v230
        %v249 = vunpack.c.l.b16 %v231
        %v250 = vunpack.c.h.b16 %v231
        %v251 = vunpack.c.l.b16 %v232
        %v252 = vunpack.c.h.b16 %v232
        %v253 = vunpack.c.l.b16 %v233
        %v254 = vunpack.c.h.b16 %v233
        %v255 = vunpack.c.l.b16 %v234
        %v256 = vunpack.c.h.b16 %v234
        %v257 = vunpack.c.l.b16 %v235
        %v258 = vunpack.c.h.b16 %v235
        %v259 = vunpack.c.l.b16 %v236
        %v260 = vunpack.c.h.b16 %v236
        %v261 = vpack.c.b16 %v247, %v245
        %v262 = vpack.c.b16 %v248, %v246
        %v263 = vpack.c.b16 %v251, %v249
        %v264 = vpack.c.b16 %v252, %v250
        %v265 = vpack.c.b16 %v255, %v253
        %v266 = vpack.c.b16 %v256, %v254
        %v267 = vpack.c.b16 %v259, %v257
        %v268 = vpack.c.b16 %v260, %v258
        %vm277 = vcmask 523264
        %v279 = vsel %vm277, %v228, 0
        %281 = vmatpush.bf16.msra.mxu0 0
        %282 = vmatpush.bf16.msra.mxu0 0
        %283 = vmatpush.bf16.msra.mxu0 0
        %284 = vmatpush.bf16.msra.mxu0 0
        %285 = vmatpush.bf16.msra.mxu0 %v267
        %286 = vmatpush.bf16.msra.mxu0 %v265
        %287 = vmatpush.bf16.msra.mxu0 %v263
        %288 = vmatpush.bf16.msra.mxu0 %v261
        %289 = vmatmul.f32.gmra.mxu0 %v279
        %v290 = vpop.f32.mrf.mxu0
        %v291 = vadd.f32 0.0, %v290
        %292 = vdwg.mxu0
        %293 = vmatpush.bf16.msra.mxu0 0
        %294 = vmatpush.bf16.msra.mxu0 0
        %295 = vmatpush.bf16.msra.mxu0 0
        %296 = vmatpush.bf16.msra.mxu0 0
        %297 = vmatpush.bf16.msra.mxu0 %v268
        %298 = vmatpush.bf16.msra.mxu0 %v266
        %299 = vmatpush.bf16.msra.mxu0 %v264
        %300 = vmatpush.bf16.msra.mxu0 %v262
        %301 = vmatmul.f32.gmra.mxu0 %v279
        %v302 = vpop.f32.mrf.mxu0
        %v303 = vadd.f32 0.0, %v302
        %304 = vdwg.mxu0
        %v307 = vrot.slane %v303, 4
        %vm308 = vcmask 1043456
        %v309 = vsel %vm308, %v291, %v307
        %v311 = vadd.f32 %v227, %v309
        %312 = vst [vmem:[#allocation2] sm:$0xff] %v311
        // Predicated region
        $region45: #{tpu_custom_call.1} parent=27 // pred_check
          %p313 = pneg %p216
        $region46: #{tpu_custom_call.1} parent=27 // pred_check_branch
          %315 = sbr.rel (%p313) target = $region48
        $region47: #{tpu_custom_call.1} parent=27 // pred_region
          %v316 = vld [vmem:[#allocation2] sm:$0xff]
          %v317 = vmul.f32 %v316, %v316
          %v319 = vrot.slane %v316, 4
          %v321 = vmul.f32 %v319, %v319
          %v322 = vadd.f32 %v317, %v321
          %v323 = vrsqrt.pop %v322
          %v324 = vmul.f32 %v323, %v322
          %v325 = vmul.f32 %v324, %v323
          %v326 = vmul.f32 0.5, %v325
          %v327 = vsub.f32 1.5, %v326
          %v328 = vmul.f32 %v323, %v327
          %v329 = vmul.f32 %v322, %v328
          %vm330 = vcmp.eq.f32.partialorder %v322, inf
          %v331 = vsel %vm330, %v322, %v329
          %vm332 = vcmp.eq.f32.partialorder %v322, 0.0
          %v333 = vand.u32 %v322, 2147483648
          %v334 = vsel %vm332, %v333, %v331
          %v335 = vld [vmem:[#allocation3] sm:$0x1]
          %v336 = vsel %vm308, %v334, 0.0
          %337 = vadd.xlane.f32.xlu0 %v336
          %v338 = vpop.xlane.xlu0 %337
          %v339 = vsel %vm308, %v338, 0.0
          %v340 = vrot.slane %v339, 4
          %v341 = vadd.f32 %v339, %v340
          %v342 = vrot.slane %v341, 2
          %v343 = vadd.f32 %v341, %v342
          %v344 = vrot.slane %v343, 1
          %v345 = vadd.f32 %v343, %v344
          %v346 = vadd.f32 %v335, %v345
          %vm347 = vcmask 0
          %348 = vst.msk [vmem:[#allocation3] sm:$0x1] %vm347, %v346
        $region48: #{tpu_custom_call.1} parent=27 // pred_fallthru
          _
        // Predicated region
        $region49: #{tpu_custom_call.1} parent=27 // pred_check
          _
        $region50: #{tpu_custom_call.1} parent=27 // pred_check_branch
          %350 = sbr.rel (%p217) target = $region52
        $region51: #{tpu_custom_call.1} parent=27 // pred_region
          %v351 = vld [vmem:[#allocation3] sm:$0x1]
          %v352 = vmul.f32 %v351, 0.00390625
          %vm353 = vcmask 0
          %354 = vst.msk [vmem:[%s213] sm:$0x1] %vm353, %v352
        $region52: #{tpu_custom_call.1} parent=27 // pred_fallthru
          _
        %p355 = scmp.lt.s32.totalorder %s22, 1
        %s356 = scalar_select %p355, %s22, 1
        %s357 = scalar_lea.vmem %s2, %s356
        // Predicated region
        $region53: #{tpu_custom_call.1} parent=27 // pred_check
          %p358 = pneg %p110
        $region54: #{tpu_custom_call.1} parent=27 // pred_check_branch
          %360 = sbr.rel (%p358) target = $region56
        $region55: #{tpu_custom_call.1} parent=27 // pred_region
          _
        $region56: #{tpu_custom_call.1} parent=27 // pred_fallthru
          _
      $region28: #{tpu_custom_call.1} parent=5 // pred_fallthru
        _
      %p361 = scmp.le.s32.totalorder 2, %s12
      // Predicated region
      $region57: #{tpu_custom_call.1} parent=5 // pred_check
        %p362 = pneg %p361
      $region58: #{tpu_custom_call.1} parent=5 // pred_check_branch
        %364 = sbr.rel (%p362) target = $region60
      $region59: #{tpu_custom_call.1} parent=5 // pred_region
        %s365 = ssub.s32 %s12, 2
        // Predicated region
        $region61: #{tpu_custom_call.1} parent=59 // pred_check
          %p366 = pneg %p116
        $region62: #{tpu_custom_call.1} parent=59 // pred_check_branch
          %368 = sbr.rel (%p366) target = $region64
        $region63: #{tpu_custom_call.1} parent=59 // pred_region
          %p369 = scmp.lt.s32.totalorder %s25, 1
          %s370 = scalar_select %p369, %s25, 1
          %s371 = scalar_lea.vmem %s2, %s370
        $region64: #{tpu_custom_call.1} parent=59 // pred_fallthru
          _
      $region60: #{tpu_custom_call.1} parent=5 // pred_fallthru
        _
    $region6: #{tpu_custom_call.1} parent=1 // loop_footer
      %s16 = sadd.s32 1, %s12
    $region7: #{tpu_custom_call.1} parent=1 // loop_footer_branch
      %11 = sbr.rel target = $region3
    $region8: #{tpu_custom_call.1} parent=1 // loop_exit
      _
    %372 = vsyncpa [#allocation5], 1
    %s373 = scalar_lea.sflag [#allocation5], 1
    %374 = vsyncpa %s373, 1
    %375 = vsyncpa [#allocation7], 1
    %s376 = scalar_lea.sflag [#allocation7], 1
    %377 = vsyncpa %s376, 1

</llo_original>
